<compile_context>
chip_gen: v5e
topology: v5e:2x2
jax: 0.10.0
libtpu: 0.0.40
codegen_flags: <defaults>
</compile_context>

<pallas_src>
import functools

import jax
import jax.numpy as jnp
from jax.experimental import pallas as pl
from jax.experimental.pallas import tpu as pltpu

BN_EPS = 1e-5

# Scoped VMEM limit we request, and the budget we allow the (double-buffered) x tile.
_VMEM_LIMIT_BYTES = 32 * 1024 * 1024         # safe on v5e/v6e (128 MiB) and v7x (64 MiB/TC)
_X_TILE_VMEM_BUDGET = 24 * 1024 * 1024


def _round_up(n: int, m: int) -> int:
    return ((n + m - 1) // m) * m


# ---------------------------------------------------------------------------
# Fused kernel: encoder stub (matmul + tanh) -> folded classifier (mul + reduce)
# ---------------------------------------------------------------------------
def _entity_size_kernel(beff_ref, x_ref, encw_ref, weff_ref, o_ref):
    # Encoder stub: (bt, K) @ (K, L) on the MXU (bf16 or f32 inputs, f32 accumulate),
    # tanh on the EUP (otherwise-idle slot).
    feats = jnp.tanh(
        jnp.dot(x_ref[...], encw_ref[...], preferred_element_type=jnp.float32)
    )
    # Folded BN1 -> Linear1 -> BN2 -> Linear2: a single affine map.  VPU multiply +
    # lane reduction (XLU) instead of an N=1 MXU matmul.
    # TODO(synk): if the (bt, 1) masked output store ever shows in a profile at large B,
    # emit a lane-dense (1, bt) row per tile instead (low priority per review).
    o_ref[...] = jnp.sum(feats * weff_ref[...], axis=-1, keepdims=True) + beff_ref[0]


def fold_classifier_params(params):
    """Fold eval-mode BN1 -> Linear1 -> BN2 -> Linear2 into (w_eff_row, b_eff).

    y = (((f*s1 + t1) @ W1 + b1) * s2 + t2) @ w2 + b2  =  f @ W_eff + b_eff
    Valid only with frozen (eval-mode) BatchNorm running statistics.
    """
    s1 = params["bn1_gamma"] * jax.lax.rsqrt(params["bn1_var"] + BN_EPS)   # (1, L)
    t1 = params["bn1_beta"] - params["bn1_mean"] * s1                      # (1, L)
    s2 = params["bn2_gamma"] * jax.lax.rsqrt(params["bn2_var"] + BN_EPS)   # (1, H)
    t2 = params["bn2_beta"] - params["bn2_mean"] * s2                      # (1, H)
    w_eff = (s1.T * params["w1"] * s2) @ params["w2"]                      # (L, 1)
    b_eff = ((t1 @ params["w1"] + params["b1"]) * s2 + t2) @ params["w2"] + params["b2"]
    return w_eff.T.astype(jnp.float32), b_eff.reshape(1).astype(jnp.float32)  # (1,L),(1,)


def _choose_block_b(B: int, K: int, itemsize: int, block_b: int) -> int:
    """Pick the batch-tile height (all host-side Python on static shapes)."""
    sub = 16 if itemsize == 2 else 8                       # sublane tile for the x dtype
    bt = _round_up(max(1, min(block_b, B)), sub)
    # v7x megacore: with dimension_semantics=("parallel",) the grid is sharded across the
    # two TensorCores; ensure >= 4 steps (>= 2 per core) when the batch is large enough.
    if B >= 4 * sub:
        bt = min(bt, _round_up(pl.cdiv(B, 4), sub))
    # VMEM cap: the x tile is double-buffered by the pipeline; keep it inside budget.
    bt_cap = max(sub, (_X_TILE_VMEM_BUDGET // (2 * K * itemsize)) // sub * sub)
    return min(bt, bt_cap)


# ---------------------------------------------------------------------------
# Wrapper: full EntitySize.forward (encoder -> flatten -> classifier), fused.
# ---------------------------------------------------------------------------
@functools.partial(jax.jit, static_argnames=("block_b",))
def entity_size_forward(x, enc_w, params, *, block_b: int = 1024):
    """x: (B, C, S, S) NCHW; enc_w: (C*S*S, L) stub-encoder weight. Returns (B, 1) f32.

    x is streamed in its incoming dtype (pass bf16 from the producer to halve HBM
    traffic; no wrapper-side astype / HBM round trip is inserted here).
    """
    # TODO(synk): the real encoder is an external nn.Module passed to forward(); a
    # deterministic tanh(linear) stub stands in and is fused directly into the kernel.
    B = x.shape[0]
    x_flat = x.reshape(B, -1)                              # (B, K); K = C*S*S (free reshape)
    K = x_flat.shape[1]
    L = enc_w.shape[1]
    enc_w = enc_w.astype(x_flat.dtype)                     # small weight, one-time cast
    itemsize = jnp.dtype(x_flat.dtype).itemsize

    w_eff_row, b_eff = fold_classifier_params(params)      # (1, L) f32, (1,) f32

    bt = _choose_block_b(B, K, itemsize, block_b)
    grid = (pl.cdiv(B, bt),)                               # partial last block; no jnp.pad copy

    cost = pl.CostEstimate(
        flops=2 * B * K * L + 2 * B * L,
        transcendentals=B * L,
        bytes_accessed=B * K * itemsize + K * L * itemsize + (L + 1 + B) * 4,
    )

    # TODO(synk): if the real encoder makes K large, add an "arbitrary" K grid axis with a
    # VMEM f32 accumulator (pl.when init/finalize) instead of keeping (bt, K) and (K, L)
    # resident, and single-buffer the constant-index weight blocks; with the 32 KiB stub
    # weight here that saves nothing, so it is intentionally not done.
    out = pl.pallas_call(
        _entity_size_kernel,
        out_shape=jax.ShapeDtypeStruct((B, 1), jnp.float32),
        grid=grid,
        in_specs=[
            pl.BlockSpec(memory_space=pltpu.MemorySpace.SMEM),   # b_eff scalar (1,)
            pl.BlockSpec((bt, K), lambda i: (i, 0)),             # x batch tile (HBM stream)
            pl.BlockSpec((K, L), lambda i: (0, 0)),              # enc_w (resident)
            pl.BlockSpec((1, L), lambda i: (0, 0)),              # folded classifier row
        ],
        out_specs=pl.BlockSpec((bt, 1), lambda i: (i, 0)),
        compiler_params=pltpu.CompilerParams(
            dimension_semantics=("parallel",),                   # megacore shard on v7x
            vmem_limit_bytes=_VMEM_LIMIT_BYTES,
        ),
        cost_estimate=cost,
    )(b_eff, x_flat, enc_w, w_eff_row)
    return out


# ---------------------------------------------------------------------------
# Params + pure-JAX reference (layered, un-folded) for correctness checking.
# ---------------------------------------------------------------------------
def init_params(key, latent_space_size, hidden_layer_size):
    ks = jax.random.split(key, 8)
    L, H = latent_space_size, hidden_layer_size
    return {
        "bn1_gamma": jax.random.uniform(ks[0], (1, L), jnp.float32, 0.5, 1.5),
        "bn1_beta":  jax.random.normal(ks[1], (1, L), jnp.float32) * 0.1,
        "bn1_mean":  jax.random.normal(ks[2], (1, L), jnp.float32) * 0.1,
        "bn1_var":   jax.random.uniform(ks[3], (1, L), jnp.float32, 0.5, 1.5),
        "w1": jax.random.normal(ks[4], (L, H), jnp.float32) / jnp.sqrt(L),
        "b1": jax.random.normal(ks[5], (1, H), jnp.float32) * 0.01,
        "bn2_gamma": jnp.ones((1, H), jnp.float32),
        "bn2_beta":  jnp.zeros((1, H), jnp.float32),
        "bn2_mean":  jnp.zeros((1, H), jnp.float32),
        "bn2_var":   jnp.ones((1, H), jnp.float32),
        "w2": jax.random.normal(ks[6], (H, 1), jnp.float32) / jnp.sqrt(H),
        "b2": jax.random.normal(ks[7], (1, 1), jnp.float32) * 0.01,
    }


def reference_forward(x, enc_w, p):
    B = x.shape[0]
    feats = jnp.tanh(x.reshape(B, -1) @ enc_w)            # encoder(input)[0], flattened
    h = (feats - p["bn1_mean"]) / jnp.sqrt(p["bn1_var"] + BN_EPS) * p["bn1_gamma"] + p["bn1_beta"]
    h = h @ p["w1"] + p["b1"]
    h = (h - p["bn2_mean"]) / jnp.sqrt(p["bn2_var"] + BN_EPS) * p["bn2_gamma"] + p["bn2_beta"]
    return h @ p["w2"] + p["b2"]


if __name__ == "__main__":
    B, C, S = 2, 1, 16          # entity grids: (B, 1, 16, 16) NCHW, per get_input_features
    latent_space_size = 32      # = prod of encoder output feature-map dims
    hidden_layer_size = 32

    key = jax.random.PRNGKey(0)
    k_x, k_enc, k_p = jax.random.split(key, 3)

    x = jax.random.uniform(k_x, (B, C, S, S), jnp.float32, 0.0, 9.0)
    enc_w = jax.random.normal(k_enc, (C * S * S, latent_space_size), jnp.float32) / jnp.sqrt(C * S * S)
    params = init_params(k_p, latent_space_size, hidden_layer_size)

    # 1) f32 stream, tiny batch (single partial block).
    out = jax.block_until_ready(entity_size_forward(x, enc_w, params))
    ref = reference_forward(x, enc_w, params)
    assert out.shape == (B, 1), out.shape
    assert jnp.allclose(out, ref, atol=1e-4, rtol=1e-4), (out, ref)

    # 2) bf16 stream from the "producer" (no wrapper cast): halves HBM bytes.
    x_bf16 = x.astype(jnp.bfloat16)
    out_bf16 = jax.block_until_ready(entity_size_forward(x_bf16, enc_w, params))
    ref_bf16 = reference_forward(
        x_bf16.astype(jnp.float32), enc_w.astype(jnp.bfloat16).astype(jnp.float32), params
    )
    assert out_bf16.shape == (B, 1), out_bf16.shape
    assert jnp.allclose(out_bf16, ref_bf16, atol=1e-2, rtol=1e-2), (out_bf16, ref_bf16)

    # 3) Misaligned larger batch: exercises the pad-free pl.cdiv grid, the >=4-step
    #    megacore split, and the partial last block (B=130 -> bt=40, grid=4).
    B2 = 130
    x2 = jax.random.uniform(jax.random.PRNGKey(1), (B2, C, S, S), jnp.float32, 0.0, 9.0)
    out2 = jax.block_until_ready(entity_size_forward(x2, enc_w, params))
    ref2 = reference_forward(x2, enc_w, params)
    assert out2.shape == (B2, 1), out2.shape
    assert jnp.allclose(out2, ref2, atol=1e-4, rtol=1e-4), (out2, ref2)

    print("KERNEL_OK")
</pallas_src>

<mosaic_0001>
module attributes {stable_mosaic.version = 11 : i64} {
  func.func @_entity_size_kernel(%arg0: i32, %arg1: memref<1xf32, #tpu.memory_space<smem>>, %arg2: memref<8x256xf32, #tpu.memory_space<vmem>>, %arg3: memref<256x32xf32, #tpu.memory_space<vmem>>, %arg4: memref<1x32xf32, #tpu.memory_space<vmem>>, %arg5: memref<8x1xf32, #tpu.memory_space<vmem>>) attributes {dimension_semantics = [#tpu.dimension_semantics<parallel>], iteration_bounds = array<i64: 1>, scalar_prefetch = 0 : i64, scratch_operands = 0 : i64, tpu.core_type = #tpu.core_type<tc>, window_params = [{transform_indices = @transform_0, window_bounds = array<i64: 1>}, {transform_indices = @transform_1, window_bounds = array<i64: 8, 256>}, {pipeline_mode = #tpu.pipeline_mode<synchronous>, transform_indices = @transform_2, window_bounds = array<i64: 256, 32>}, {pipeline_mode = #tpu.pipeline_mode<synchronous>, transform_indices = @transform_3, window_bounds = array<i64: 1, 32>}, {transform_indices = @transform_4, window_bounds = array<i64: 8, 1>}]} {
    %c0 = arith.constant 0 : index
    %c0_0 = arith.constant 0 : index
    %0 = vector.load %arg2[%c0, %c0_0] : memref<8x256xf32, #tpu.memory_space<vmem>>, vector<8x256xf32>
    %c0_1 = arith.constant 0 : index
    %c0_2 = arith.constant 0 : index
    %1 = vector.load %arg3[%c0_1, %c0_2] : memref<256x32xf32, #tpu.memory_space<vmem>>, vector<256x32xf32>
    %cst = arith.constant dense<0.000000e+00> : vector<8x32xf32>
    %2 = tpu.matmul %0, %1, %cst {dimension_numbers = #tpu.dot_dimension_numbers<[1], [0], [0], [1], [0, 0, 1, 1], [], []>} : vector<8x256xf32>, vector<256x32xf32>, vector<8x32xf32> -> vector<8x32xf32>
    %3 = math.tanh %2 : vector<8x32xf32>
    %c0_3 = arith.constant 0 : index
    %c0_4 = arith.constant 0 : index
    %4 = vector.load %arg4[%c0_3, %c0_4] : memref<1x32xf32, #tpu.memory_space<vmem>>, vector<1x32xf32>
    %5 = vector.broadcast %4 : vector<1x32xf32> to vector<8x32xf32>
    %6 = arith.mulf %3, %5 : vector<8x32xf32>
    %cst_5 = arith.constant dense<0.000000e+00> : vector<8xf32>
    %7 = vector.multi_reduction <add>, %6, %cst_5 [1] : vector<8x32xf32> to vector<8xf32>
    %8 = vector.shape_cast %7 : vector<8xf32> to vector<8x1xf32>
    %c0_6 = arith.constant 0 : index
    %9 = memref.load %arg1[%c0_6] : memref<1xf32, #tpu.memory_space<smem>>
    %10 = vector.broadcast %9 : f32 to vector<8x1xf32>
    %11 = arith.addf %8, %10 : vector<8x1xf32>
    %c0_7 = arith.constant 0 : index
    %c0_8 = arith.constant 0 : index
    %12 = vector.load %arg5[%c0_7, %c0_8] : memref<8x1xf32, #tpu.memory_space<vmem>>, vector<8x1xf32>
    tpu.vector_store %arg5[%c0_7, %c0_8], %11 {strides = array<i32>} : memref<8x1xf32, #tpu.memory_space<vmem>>, vector<8x1xf32>,
    return
  }
  func.func @transform_0(%arg0: i32) -> i32 {
    %c0_i32 = arith.constant 0 : i32
    %c0_i32_0 = arith.constant 0 : i32
    return %c0_i32 : i32
  }
  func.func @transform_1(%arg0: i32) -> (i32, i32) {
    %c0_i32 = arith.constant 0 : i32
    %c0_i32_0 = arith.constant 0 : i32
    return %arg0, %c0_i32 : i32, i32
  }
  func.func @transform_2(%arg0: i32) -> (i32, i32) {
    %c0_i32 = arith.constant 0 : i32
    %c0_i32_0 = arith.constant 0 : i32
    %c0_i32_1 = arith.constant 0 : i32
    return %c0_i32, %c0_i32_0 : i32, i32
  }
  func.func @transform_3(%arg0: i32) -> (i32, i32) {
    %c0_i32 = arith.constant 0 : i32
    %c0_i32_0 = arith.constant 0 : i32
    %c0_i32_1 = arith.constant 0 : i32
    return %c0_i32, %c0_i32_0 : i32, i32
  }
  func.func @transform_4(%arg0: i32) -> (i32, i32) {
    %c0_i32 = arith.constant 0 : i32
    %c0_i32_0 = arith.constant 0 : i32
    return %arg0, %c0_i32 : i32, i32
  }
}

</mosaic_0001>

<llo_original>
// kernel: entity_size_forward.1
$region0: #{entity_size_forward.1}
  #allocation0 [shape = 'u32[]', space=smem, size = 0x4, offset = 0x4, fixed_abs, tag = 'smem constant byte address 0x4 - core index']
  #allocation1 [shape = 'u32[72,128]{1,0:T(1,128)}', space=vmem, size = 0x9000, scoped, tag = 'internal scratch']
  #allocation2 [shape = 'f32[1]{0:T(128)S(6)}', space=smem, size = 0x200, scoped, tag = 'scoped memory for entity_size_forward.1']
  %s0 = inlined_call_operand.<no memory space> [shape: f32[1], index: 0, kind: input, shape index: {}]
  %s1 = inlined_call_operand.vmem [shape: f32[2,256], index: 1, kind: input, shape index: {}]
  %s2 = inlined_call_operand.vmem [shape: f32[256,32], index: 2, kind: input, shape index: {}]
  %s3 = inlined_call_operand.vmem [shape: f32[1,32], index: 3, kind: input, shape index: {}]
  %s4 = inlined_call_operand.vmem [shape: f32[2,1], index: 4, kind: output, shape index: {}]
  %s5 = sld [smem:[#allocation0]]
  $region56: #{entity_size_forward.1} parent=0
    _
  %s7 = ssub.s32 1, %s5
  %s8 = scalar_select 0, %s7, %s5
  %9 = sst [smem:[#allocation2]] %s0
  $region1: #{entity_size_forward.1} parent=0
    #allocation3 [shape = 'u8[4096]{0}', space=vmem, size = 0x1000, scoped, tag = 'output window, operand 0, single buffered']
    // Predicated region
    $region2: #{entity_size_forward.1} parent=1 // pred_check
      _
    $region3: #{entity_size_forward.1} parent=1 // pred_check_branch
      %11 = sbr.rel (0) target = $region5
    $region4: #{entity_size_forward.1} parent=1 // pred_region
      _
    $region5: #{entity_size_forward.1} parent=1 // pred_fallthru
      _
    // Predicated region
    $region6: #{entity_size_forward.1} parent=1 // pred_check
      _
    $region7: #{entity_size_forward.1} parent=1 // pred_check_branch
      %13 = sbr.rel (0) target = $region9
    $region8: #{entity_size_forward.1} parent=1 // pred_region
      _
    $region9: #{entity_size_forward.1} parent=1 // pred_fallthru
      _
    // Predicated region
    $region10: #{entity_size_forward.1} parent=1 // pred_check
      _
    $region11: #{entity_size_forward.1} parent=1 // pred_check_branch
      %15 = sbr.rel (0) target = $region13
    $region12: #{entity_size_forward.1} parent=1 // pred_region
      _
    $region13: #{entity_size_forward.1} parent=1 // pred_fallthru
      _
    // Predicated region
    $region14: #{entity_size_forward.1} parent=1 // pred_check
      _
    $region15: #{entity_size_forward.1} parent=1 // pred_check_branch
      %17 = sbr.rel (0) target = $region17
    $region16: #{entity_size_forward.1} parent=1 // pred_region
      _
    $region17: #{entity_size_forward.1} parent=1 // pred_fallthru
      _
    %v18 = vld [vmem:[%s1] sm:$0xf]
    %v19 = vld [vmem:[%s1 + $0x4] sm:$0xf]
    %v20 = vld [vmem:[%s1 + $0x8] sm:$0xf]
    %v21 = vld [vmem:[%s1 + $0xc] sm:$0xf]
    %v22 = vld [vmem:[%s2] sm:$0xff]
    %v23 = vld [vmem:[%s2 + $0x8] sm:$0xff]
    %v24 = vld [vmem:[%s2 + $0x10] sm:$0xff]
    %v25 = vld [vmem:[%s2 + $0x18] sm:$0xff]
    %v26 = vld [vmem:[%s2 + $0x20] sm:$0xff]
    %v27 = vld [vmem:[%s2 + $0x28] sm:$0xff]
    %v28 = vld [vmem:[%s2 + $0x30] sm:$0xff]
    %v29 = vld [vmem:[%s2 + $0x38] sm:$0xff]
    %v30 = vld [vmem:[%s2 + $0x40] sm:$0xff]
    %v31 = vld [vmem:[%s2 + $0x48] sm:$0xff]
    %v32 = vld [vmem:[%s2 + $0x50] sm:$0xff]
    %v33 = vld [vmem:[%s2 + $0x58] sm:$0xff]
    %v34 = vld [vmem:[%s2 + $0x60] sm:$0xff]
    %v35 = vld [vmem:[%s2 + $0x68] sm:$0xff]
    %v36 = vld [vmem:[%s2 + $0x70] sm:$0xff]
    %v37 = vld [vmem:[%s2 + $0x78] sm:$0xff]
    %v38 = vld [vmem:[%s2 + $0x80] sm:$0xff]
    %v39 = vld [vmem:[%s2 + $0x88] sm:$0xff]
    %v40 = vld [vmem:[%s2 + $0x90] sm:$0xff]
    %v41 = vld [vmem:[%s2 + $0x98] sm:$0xff]
    %v42 = vld [vmem:[%s2 + $0xa0] sm:$0xff]
    %v43 = vld [vmem:[%s2 + $0xa8] sm:$0xff]
    %v44 = vld [vmem:[%s2 + $0xb0] sm:$0xff]
    %v45 = vld [vmem:[%s2 + $0xb8] sm:$0xff]
    %v46 = vld [vmem:[%s2 + $0xc0] sm:$0xff]
    %v47 = vld [vmem:[%s2 + $0xc8] sm:$0xff]
    %v48 = vld [vmem:[%s2 + $0xd0] sm:$0xff]
    %v49 = vld [vmem:[%s2 + $0xd8] sm:$0xff]
    %v50 = vld [vmem:[%s2 + $0xe0] sm:$0xff]
    %v51 = vld [vmem:[%s2 + $0xe8] sm:$0xff]
    %v52 = vld [vmem:[%s2 + $0xf0] sm:$0xff]
    %v53 = vld [vmem:[%s2 + $0xf8] sm:$0xff]
    %58 = vst [vmem:[#allocation1] ss:$4 sm:$0xff] %v18
    %s59 = scalar_lea.vmem [#allocation1], 1
    %60 = vst [vmem:[%s59] ss:$4 sm:$0xff] %v19
    %s61 = scalar_lea.vmem [#allocation1], 2
    %62 = vst [vmem:[%s61] ss:$4 sm:$0xff] %v20
    %s63 = scalar_lea.vmem [#allocation1], 3
    %64 = vst [vmem:[%s63] ss:$4 sm:$0xff] %v21
    %v65 = vld.sshfl [vmem:[#allocation1] sm:$0xff pattern:$0x73625140]
    %v66 = vld.sshfl [vmem:[#allocation1 + $0x8] sm:$0xff pattern:$0x73625140]
    %69 = vmatpush.msra.mxu0 %v37
    %70 = vmatpush.msra.mxu0 %v36
    %71 = vmatpush.msra.mxu0 %v35
    %72 = vmatpush.msra.mxu0 %v34
    %73 = vmatpush.msra.mxu0 %v33
    %74 = vmatpush.msra.mxu0 %v32
    %75 = vmatpush.msra.mxu0 %v31
    %76 = vmatpush.msra.mxu0 %v30
    %77 = vmatpush.msra.mxu0 %v29
    %78 = vmatpush.msra.mxu0 %v28
    %79 = vmatpush.msra.mxu0 %v27
    %80 = vmatpush.msra.mxu0 %v26
    %81 = vmatpush.msra.mxu0 %v25
    %82 = vmatpush.msra.mxu0 %v24
    %83 = vmatpush.msra.mxu0 %v23
    %84 = vmatpush.msra.mxu0 %v22
    %85 = vmatmul.f32.gmra.mxu0 %v65
    %v86 = vpop.f32.mrf.mxu0
    %v87 = vadd.f32 0.0, %v86
    %88 = vdwg.mxu0
    %89 = vmatpush.msra.mxu0 %v53
    %90 = vmatpush.msra.mxu0 %v52
    %91 = vmatpush.msra.mxu0 %v51
    %92 = vmatpush.msra.mxu0 %v50
    %93 = vmatpush.msra.mxu0 %v49
    %94 = vmatpush.msra.mxu0 %v48
    %95 = vmatpush.msra.mxu0 %v47
    %96 = vmatpush.msra.mxu0 %v46
    %97 = vmatpush.msra.mxu0 %v45
    %98 = vmatpush.msra.mxu0 %v44
    %99 = vmatpush.msra.mxu0 %v43
    %100 = vmatpush.msra.mxu0 %v42
    %101 = vmatpush.msra.mxu0 %v41
    %102 = vmatpush.msra.mxu0 %v40
    %103 = vmatpush.msra.mxu0 %v39
    %104 = vmatpush.msra.mxu0 %v38
    %105 = vmatmul.f32.gmra.mxu0 %v66
    %v106 = vpop.f32.mrf.mxu0
    %v107 = vadd.f32 %v87, %v106
    %108 = vdwg.mxu0
    %v109 = vtanh.pop %v107
    %v110 = vld [vmem:[%s3] sm:$0x1]
    %v112 = vperm.slane %v110, 0
    %v114 = vmul.f32 %v109, %v112
    %vm115 = vcmask 261120
    %v116 = vsel %vm115, %v114, 0.0
    %117 = vadd.xlane.f32.xlu0 %v116
    %v118 = vpop.xlane.xlu0 %117
    %s119 = sld [smem:[#allocation2]]
    %v120 = vstv %s119
    %v121 = vadd.f32 %v118, %v120
    %vm122 = vcmask 7168
    %123 = vst.msk [vmem:[#allocation3] sm:$0xff] %vm122, %v121
    // Predicated region
    $region18: #{entity_size_forward.1} parent=1 // pred_check
      _
    $region19: #{entity_size_forward.1} parent=1 // pred_check_branch
      %125 = sbr.rel (0) target = $region21
    $region20: #{entity_size_forward.1} parent=1 // pred_region
      // Predicated region
      $region22: #{entity_size_forward.1} parent=20 // pred_check
        _
      $region23: #{entity_size_forward.1} parent=20 // pred_check_branch
        %127 = sbr.rel (0) target = $region25
      $region24: #{entity_size_forward.1} parent=20 // pred_region
        // Predicated region
        $region26: #{entity_size_forward.1} parent=24 // pred_check
          _
        $region27: #{entity_size_forward.1} parent=24 // pred_check_branch
          %129 = sbr.rel target = $region29
        $region28: #{entity_size_forward.1} parent=24 // pred_region
          // Predicated region
          $region41: #{entity_size_forward.1} parent=28 // pred_check
            _
          $region42: #{entity_size_forward.1} parent=28 // pred_check_branch
            %145 = sbr.rel (0) target = $region44
          $region43: #{entity_size_forward.1} parent=28 // pred_region
            %s147 = ssub.s32 4, 1
            loop: start=0, step=1, limit=1
            $region45: #{entity_size_forward.1} parent=43 // loop_pre_header
              _
            $region46: #{entity_size_forward.1} parent=43 // loop_header
              %s149 = sphi 0, %s153
              %p150 = scmp.ge.s32.totalorder %s149, 1
              %s154 = sphi [#allocation3], [#allocation3]
              %s155 = sphi %s4, %s4
            $region47: #{entity_size_forward.1} parent=43 // loop_header_branch
              %152 = sbr.rel (%p150) target = $region51
            $region48: #{entity_size_forward.1} parent=43 // loop_body
              %v156 = vld [vmem:[%s154] sm:%s147]
              %157 = vst [vmem:[%s155] sm:%s147] %v156
            $region49: #{entity_size_forward.1} parent=43 // loop_footer
              %s153 = sadd.s32 1, %s149
            $region50: #{entity_size_forward.1} parent=43 // loop_footer_branch
              %148 = sbr.rel target = $region46
            $region51: #{entity_size_forward.1} parent=43 // loop_exit
              _
          $region44: #{entity_size_forward.1} parent=28 // pred_fallthru
            _
        $region29: #{entity_size_forward.1} parent=24 // pred_fallthru
          _
        // Predicated region
        $region30: #{entity_size_forward.1} parent=24 // pred_check
          _
        $region31: #{entity_size_forward.1} parent=24 // pred_check_branch
          %131 = sbr.rel (0) target = $region33
        $region32: #{entity_size_forward.1} parent=24 // pred_region
          %s133 = ssub.s32 4, 1
          loop: start=0, step=1, limit=1
          $region34: #{entity_size_forward.1} parent=32 // loop_pre_header
            _
          $region35: #{entity_size_forward.1} parent=32 // loop_header
            %s135 = sphi 0, %s139
            %p136 = scmp.ge.s32.totalorder %s135, 1
            %s140 = sphi [#allocation3], [#allocation3]
            %s141 = sphi %s4, %s4
          $region36: #{entity_size_forward.1} parent=32 // loop_header_branch
            %138 = sbr.rel (%p136) target = $region40
          $region37: #{entity_size_forward.1} parent=32 // loop_body
            %v142 = vld [vmem:[%s140] sm:%s133]
            %143 = vst [vmem:[%s141] sm:%s133] %v142
          $region38: #{entity_size_forward.1} parent=32 // loop_footer
            %s139 = sadd.s32 1, %s135
          $region39: #{entity_size_forward.1} parent=32 // loop_footer_branch
            %134 = sbr.rel target = $region35
          $region40: #{entity_size_forward.1} parent=32 // loop_exit
            _
        $region33: #{entity_size_forward.1} parent=24 // pred_fallthru
          _
      $region25: #{entity_size_forward.1} parent=20 // pred_fallthru
        _
      %158 = vnop
    $region21: #{entity_size_forward.1} parent=1 // pred_fallthru
      _
    // Predicated region
    $region52: #{entity_size_forward.1} parent=1 // pred_check
      _
    $region53: #{entity_size_forward.1} parent=1 // pred_check_branch
      %160 = sbr.rel (0) target = $region55
    $region54: #{entity_size_forward.1} parent=1 // pred_region
      _
    $region55: #{entity_size_forward.1} parent=1 // pred_fallthru
      _

</llo_original>
